<compile_context>
chip_gen: v7x
topology: tpu7x:2x2x1
jax: 0.10.0
libtpu: 0.0.40
codegen_flags: <defaults>
</compile_context>

<pallas_src>
import functools
import math

import jax
import jax.numpy as jnp
from jax.experimental import pallas as pl
from jax.experimental.pallas import tpu as pltpu

CUTOFF = 0.25                 # threshold
PATCH_SIZE = 16               # patch size
PATCH_F1_LOSS_WEIGHT = 0.4    # w
STEEPNESS = 50.0              # slope of the differentiable threshold sigmoid
EPS = 1e-7


# --------------------------------------------------------------------------- #
# Kernel: one row-tile -> partial stats [bce_sum, tp, fp, fn]
# --------------------------------------------------------------------------- #
def _mixed_patch_f1_kernel(yhat_ref, y_ref, pmct_ref, out_ref, *,
                           patch_size, binary_targets):
    # yhat_ref / y_ref : (tile_rows, W) tiles in VMEM, native HBM dtype
    # pmct_ref         : (W, W/patch) f32 constant column-pooling matrix
    # out_ref          : (1, 8, 128) f32 partial-stats tile for this grid step
    yh = yhat_ref[...].astype(jnp.float32)       # upcast after (narrow) load
    yt = y_ref[...].astype(jnp.float32)
    tile_rows, w_lanes = yh.shape
    tp_rows = tile_rows // patch_size
    inv_p = jnp.float32(1.0 / patch_size)

    # ---- other_loss: binary cross entropy (partial sum over this tile) ------
    yhc = jnp.clip(yh, EPS, 1.0 - EPS)
    if binary_targets:
        # targets are exactly {0,1}: one log per pixel (halves EUP work)
        bce_sum = -jnp.sum(jnp.log(jnp.where(yt > 0.5, yhc, 1.0 - yhc)))
    else:
        # soft labels possible: keep the full two-term BCE
        bce_sum = -jnp.sum(yt * jnp.log(yhc) + (1.0 - yt) * jnp.log(1.0 - yhc))

    # ---- patch average pooling ----------------------------------------------
    # Row pooling: grouped sublane sum on the VPU (no MXU). The reshape only
    # splits the sublane dim into (groups, 16) with the lane dim untouched, so
    # it is layout-free; the axis=1 reduce is a native sublane reduction.
    rp_h = jnp.sum(yh.reshape(tp_rows, patch_size, w_lanes), axis=1) * inv_p
    rp_t = jnp.sum(yt.reshape(tp_rows, patch_size, w_lanes), axis=1) * inv_p

    # Column pooling: tiny (tp_rows, W) @ (W, W/patch) matmul against the
    # constant matrix (entries 1/patch), kept on the MXU.
    pmct = pmct_ref[...]
    ph = jnp.dot(rp_h, pmct, preferred_element_type=jnp.float32)
    pt = jnp.dot(rp_t, pmct, preferred_element_type=jnp.float32)

    # ---- differentiable patch F1 partial stats ------------------------------
    pred = jax.nn.sigmoid(STEEPNESS * (ph - CUTOFF))   # soft patch prediction
    tgt = (pt > CUTOFF).astype(jnp.float32)            # hard patch target

    tp = jnp.sum(pred * tgt)
    fp = jnp.sum(pred) - tp            # sum(pred * (1 - tgt))
    fn = jnp.sum(tgt) - tp             # sum((1 - pred) * tgt)

    # Lane-dense partial-stats tile: stats in lanes 0..3 of every sublane.
    lane = jax.lax.broadcasted_iota(jnp.int32, (8, 128), 1)
    stats = jnp.where(lane == 0, bce_sum,
            jnp.where(lane == 1, tp,
            jnp.where(lane == 2, fp,
            jnp.where(lane == 3, fn, jnp.float32(0.0)))))
    out_ref[0, :, :] = stats


# --------------------------------------------------------------------------- #
# Tile selection
# --------------------------------------------------------------------------- #
def _sublane_align(dtype):
    """Sublane alignment needed for a packed dtype (f32:8, bf16:16, int8:32)."""
    itemsize = jnp.dtype(dtype).itemsize
    return max(8 * max(4 // max(itemsize, 1), 1), 8)


def _pick_tile_rows(total_rows, row_align, bytes_per_row, budget):
    """Largest row tile (multiple of row_align, dividing total_rows) whose
    double-buffered input footprint fits `budget`; prefer >= 4 grid steps so
    the BlockSpec pipeline overlaps DMA with compute."""
    cands = [t for t in range(row_align, total_rows + 1, row_align)
             if total_rows % t == 0 and 2 * t * bytes_per_row <= budget]
    if not cands:
        return None
    pipelined = [t for t in cands if total_rows // t >= 4]
    return max(pipelined) if pipelined else max(cands)


# --------------------------------------------------------------------------- #
# Wrapper
# --------------------------------------------------------------------------- #
def mixed_patch_f1_loss(y_hat, y, patch_size=PATCH_SIZE,
                        patch_f1_loss_weight=PATCH_F1_LOSS_WEIGHT,
                        input_window_budget_bytes=None):
    """y_hat, y: NCHW with C == 1. y_hat in [0,1] (any float dtype);
    y may be float / int8 / bool. Returns scalar f32 loss."""
    B, C, H, W = y_hat.shape
    assert C == 1 and H % patch_size == 0 and W % patch_size == 0
    total_rows = B * H
    wp = W // patch_size
    n_px = B * H * W

    # Native-dtype pass-through (no f32 copies materialized outside the kernel).
    yh2d = y_hat.reshape(total_rows, W)
    yt2d = y.reshape(total_rows, W)
    if yt2d.dtype == jnp.bool_:
        yt2d = yt2d.astype(jnp.int8)           # avoid i1 refs in the kernel
    binary_targets = bool(jnp.issubdtype(yt2d.dtype, jnp.integer))

    # Per-generation byte budget for the double-buffered input windows.
    try:
        vmem_cap = int(pltpu.get_tpu_info().vmem_capacity_bytes)
    except Exception:
        vmem_cap = 64 << 20                    # be conservative (v7x-safe)
    budget = input_window_budget_bytes
    if budget is None:
        budget = (12 << 20) if vmem_cap <= (64 << 20) else (24 << 20)

    row_align = math.lcm(patch_size,
                         _sublane_align(yh2d.dtype), _sublane_align(yt2d.dtype))
    bytes_per_row = W * (jnp.dtype(yh2d.dtype).itemsize +
                         jnp.dtype(yt2d.dtype).itemsize)
    tile_rows = _pick_tile_rows(total_rows, row_align, bytes_per_row, budget)
    if tile_rows is None:
        # Packed-dtype alignment (or a tiny budget) left no legal tile:
        # fall back to f32 streaming with the minimal patch-aligned tile.
        # TODO(synk): pad + mask rows instead of upcasting for exotic shapes.
        yh2d = yh2d.astype(jnp.float32)
        yt2d = yt2d.astype(jnp.float32)
        row_align = patch_size if patch_size % 8 == 0 else 2 * patch_size
        bytes_per_row = W * 8
        tile_rows = (_pick_tile_rows(total_rows, row_align, bytes_per_row, budget)
                     or row_align)
    n_tiles = total_rows // tile_rows

    # Constant column-pooling matrix (W, wp), entries 1/patch_size — built once
    # here (hoisted out of the kernel body), DMA'd once (constant index_map).
    col_group = jnp.arange(W, dtype=jnp.int32)[:, None] // patch_size
    pmct = (col_group == jnp.arange(wp, dtype=jnp.int32)[None, :]
            ).astype(jnp.float32) * (1.0 / patch_size)

    kernel = functools.partial(_mixed_patch_f1_kernel,
                               patch_size=patch_size,
                               binary_targets=binary_targets)

    # VMEM budget: double-buffered input windows + f32 temps + constants.
    tile_in_bytes = tile_rows * bytes_per_row
    vmem_need = 2 * tile_in_bytes + 8 * tile_rows * W * 4 + 2 * W * wp * 4 + (2 << 20)
    vmem_limit = int(min(max(vmem_need, 16 << 20), max(32 << 20, (vmem_cap * 3) // 4)))

    logs_per_px = 1 if binary_targets else 2
    col_matmul_flops = 2 * 2 * (total_rows // patch_size) * W * wp
    cost = pl.CostEstimate(
        flops=int(12 * n_px + col_matmul_flops),
        transcendentals=int(logs_per_px * n_px + (total_rows // patch_size) * wp),
        bytes_accessed=int(total_rows * bytes_per_row + W * wp * 4
                           + n_tiles * 8 * 128 * 4),
    )

    partial = pl.pallas_call(
        kernel,
        out_shape=jax.ShapeDtypeStruct((n_tiles, 8, 128), jnp.float32),
        grid=(n_tiles,),
        in_specs=[
            pl.BlockSpec((tile_rows, W), lambda i: (i, 0)),
            pl.BlockSpec((tile_rows, W), lambda i: (i, 0)),
            pl.BlockSpec((W, wp), lambda i: (0, 0)),      # constant, resident
        ],
        out_specs=pl.BlockSpec((1, 8, 128), lambda i: (i, 0, 0)),
        compiler_params=pltpu.CompilerParams(
            dimension_semantics=("parallel",),            # megacore-shardable
            vmem_limit_bytes=vmem_limit,
        ),
        cost_estimate=cost,
    )(yh2d, yt2d, pmct)

    # Tiny finalize in plain JAX (order-independent -> safe for parallel grid).
    stats = jnp.sum(partial[:, 0, :4], axis=0)
    bce_mean = stats[0] / jnp.float32(n_px)
    tp, fp, fn = stats[1], stats[2], stats[3]
    f1 = (2.0 * tp) / (2.0 * tp + fp + fn + EPS)
    w = jnp.float32(patch_f1_loss_weight)
    return (1.0 - w) * bce_mean + w * (1.0 - f1)


# --------------------------------------------------------------------------- #
# Pure-JAX reference mirroring the PyTorch forward
# --------------------------------------------------------------------------- #
def _reference(y_hat, y, patch_size=PATCH_SIZE):
    yh = y_hat[:, 0].astype(jnp.float32)
    yt = y[:, 0].astype(jnp.float32)
    yhc = jnp.clip(yh, EPS, 1.0 - EPS)
    bce = jnp.mean(-(yt * jnp.log(yhc) + (1.0 - yt) * jnp.log(1.0 - yhc)))
    B, H, W = yh.shape
    ph = yh.reshape(B, H // patch_size, patch_size,
                    W // patch_size, patch_size).mean(axis=(2, 4))
    pt = yt.reshape(B, H // patch_size, patch_size,
                    W // patch_size, patch_size).mean(axis=(2, 4))
    pred = jax.nn.sigmoid(STEEPNESS * (ph - CUTOFF))
    tgt = (pt > CUTOFF).astype(jnp.float32)
    tp = jnp.sum(pred * tgt)
    fp = jnp.sum(pred * (1.0 - tgt))
    fn = jnp.sum((1.0 - pred) * tgt)
    f1 = (2.0 * tp) / (2.0 * tp + fp + fn + EPS)
    w = PATCH_F1_LOSS_WEIGHT
    return (1.0 - w) * bce + w * (1.0 - f1)


if __name__ == "__main__":
    key = jax.random.PRNGKey(0)
    k1, k2 = jax.random.split(key)
    B, C, H, W = 2, 1, 32, 32                       # 2x2 patches of 16x16 per image
    y_hat = jax.random.uniform(k1, (B, C, H, W), dtype=jnp.float32)       # preds in (0,1)
    y = (jax.random.uniform(k2, (B, C, H, W)) > 0.5).astype(jnp.float32)  # binary targets

    ref = jax.block_until_ready(_reference(y_hat, y))

    # (1) f32 inputs, default tiling (two-term BCE path).
    loss = jax.block_until_ready(mixed_patch_f1_loss(y_hat, y))
    assert jnp.isfinite(loss), "kernel produced non-finite loss"
    assert jnp.abs(loss - ref) < 1e-3, (loss, ref)

    # (2) forced multi-tile (4 grid steps) to exercise the parallel partial-stats path.
    loss_tiled = jax.block_until_ready(
        mixed_patch_f1_loss(y_hat, y, input_window_budget_bytes=10 * 1024))
    assert jnp.isfinite(loss_tiled), "tiled kernel produced non-finite loss"
    assert jnp.abs(loss_tiled - ref) < 1e-3, (loss_tiled, ref)

    # (3) narrow HBM dtypes: bf16 preds + int8 binary targets (one-log BCE path).
    y_hat_bf16 = y_hat.astype(jnp.bfloat16)
    y_int8 = y.astype(jnp.int8)
    ref_narrow = jax.block_until_ready(
        _reference(y_hat_bf16.astype(jnp.float32), y_int8.astype(jnp.float32)))
    loss_narrow = jax.block_until_ready(mixed_patch_f1_loss(y_hat_bf16, y_int8))
    assert jnp.isfinite(loss_narrow), "narrow-dtype kernel produced non-finite loss"
    assert jnp.abs(loss_narrow - ref_narrow) < 1e-3, (loss_narrow, ref_narrow)

    print("KERNEL_OK")
</pallas_src>

<mosaic_0001>
module attributes {stable_mosaic.version = 11 : i64} {
  func.func @_mixed_patch_f1_kernel(%arg0: i32, %arg1: memref<16x32xf32, #tpu.memory_space<vmem>>, %arg2: memref<16x32xf32, #tpu.memory_space<vmem>>, %arg3: memref<32x2xf32, #tpu.memory_space<vmem>>, %arg4: memref<1x8x128xf32, #tpu.memory_space<vmem>>) attributes {dimension_semantics = [#tpu.dimension_semantics<parallel>], iteration_bounds = array<i64: 4>, scalar_prefetch = 0 : i64, scratch_operands = 0 : i64, tpu.core_type = #tpu.core_type<tc>, window_params = [{transform_indices = @transform_0, window_bounds = array<i64: 16, 32>}, {transform_indices = @transform_1, window_bounds = array<i64: 16, 32>}, {pipeline_mode = #tpu.pipeline_mode<synchronous>, transform_indices = @transform_2, window_bounds = array<i64: 32, 2>}, {transform_indices = @transform_3, window_bounds = array<i64: 1, 8, 128>}]} {
    %c0 = arith.constant 0 : index
    %c0_0 = arith.constant 0 : index
    %0 = vector.load %arg1[%c0, %c0_0] : memref<16x32xf32, #tpu.memory_space<vmem>>, vector<16x32xf32>
    %c0_1 = arith.constant 0 : index
    %c0_2 = arith.constant 0 : index
    %1 = vector.load %arg2[%c0_1, %c0_2] : memref<16x32xf32, #tpu.memory_space<vmem>>, vector<16x32xf32>
    %cst = arith.constant 1.000000e-07 : f32
    %cst_3 = arith.constant 0.99999988 : f32
    %2 = vector.broadcast %cst : f32 to vector<16x32xf32>
    %3 = arith.maximumf %2, %0 : vector<16x32xf32>
    %4 = vector.broadcast %cst_3 : f32 to vector<16x32xf32>
    %5 = arith.minimumf %4, %3 : vector<16x32xf32>
    %6 = math.log %5 : vector<16x32xf32>
    %7 = arith.mulf %1, %6 : vector<16x32xf32>
    %cst_4 = arith.constant 1.000000e+00 : f32
    %8 = vector.broadcast %cst_4 : f32 to vector<16x32xf32>
    %9 = arith.subf %8, %1 : vector<16x32xf32>
    %cst_5 = arith.constant 1.000000e+00 : f32
    %10 = vector.broadcast %cst_5 : f32 to vector<16x32xf32>
    %11 = arith.subf %10, %5 : vector<16x32xf32>
    %12 = math.log %11 : vector<16x32xf32>
    %13 = arith.mulf %9, %12 : vector<16x32xf32>
    %14 = arith.addf %7, %13 : vector<16x32xf32>
    %15 = vector.shape_cast %14 : vector<16x32xf32> to vector<1x16x32xf32>
    %cst_6 = arith.constant dense<0.000000e+00> : vector<1xf32>
    %16 = vector.multi_reduction <add>, %15, %cst_6 [1, 2] : vector<1x16x32xf32> to vector<1xf32>
    %17 = vector.shape_cast %16 : vector<1xf32> to vector<1x1x1xf32>
    %18 = vector.extract %17[0, 0, 0] : f32 from vector<1x1x1xf32>
    %cst_7 = arith.constant 0.000000e+00 : f32
    %19 = arith.subf %cst_7, %18 : f32
    %20 = vector.shape_cast %0 : vector<16x32xf32> to vector<1x16x32xf32>
    %cst_8 = arith.constant dense<0.000000e+00> : vector<1x32xf32>
    %21 = vector.multi_reduction <add>, %20, %cst_8 [1] : vector<1x16x32xf32> to vector<1x32xf32>
    %cst_9 = arith.constant 6.250000e-02 : f32
    %22 = vector.broadcast %cst_9 : f32 to vector<1x32xf32>
    %23 = arith.mulf %21, %22 : vector<1x32xf32>
    %24 = vector.shape_cast %1 : vector<16x32xf32> to vector<1x16x32xf32>
    %cst_10 = arith.constant dense<0.000000e+00> : vector<1x32xf32>
    %25 = vector.multi_reduction <add>, %24, %cst_10 [1] : vector<1x16x32xf32> to vector<1x32xf32>
    %cst_11 = arith.constant 6.250000e-02 : f32
    %26 = vector.broadcast %cst_11 : f32 to vector<1x32xf32>
    %27 = arith.mulf %25, %26 : vector<1x32xf32>
    %c0_12 = arith.constant 0 : index
    %c0_13 = arith.constant 0 : index
    %28 = vector.load %arg3[%c0_12, %c0_13] : memref<32x2xf32, #tpu.memory_space<vmem>>, vector<32x2xf32>
    %cst_14 = arith.constant dense<0.000000e+00> : vector<1x2xf32>
    %29 = tpu.matmul %23, %28, %cst_14 {dimension_numbers = #tpu.dot_dimension_numbers<[1], [0], [0], [1], [0, 0, 1, 1], [], []>} : vector<1x32xf32>, vector<32x2xf32>, vector<1x2xf32> -> vector<1x2xf32>
    %cst_15 = arith.constant dense<0.000000e+00> : vector<1x2xf32>
    %30 = tpu.matmul %27, %28, %cst_15 {dimension_numbers = #tpu.dot_dimension_numbers<[1], [0], [0], [1], [0, 0, 1, 1], [], []>} : vector<1x32xf32>, vector<32x2xf32>, vector<1x2xf32> -> vector<1x2xf32>
    %cst_16 = arith.constant 2.500000e-01 : f32
    %31 = vector.broadcast %cst_16 : f32 to vector<1x2xf32>
    %32 = arith.subf %29, %31 : vector<1x2xf32>
    %cst_17 = arith.constant 5.000000e+01 : f32
    %33 = vector.broadcast %cst_17 : f32 to vector<1x2xf32>
    %34 = arith.mulf %33, %32 : vector<1x2xf32>
    %35 = arith.negf %34 : vector<1x2xf32>
    %36 = math.exp %35 : vector<1x2xf32>
    %cst_18 = arith.constant 1.000000e+00 : f32
    %37 = vector.broadcast %cst_18 : f32 to vector<1x2xf32>
    %38 = arith.addf %37, %36 : vector<1x2xf32>
    %39 = arith.divf %37, %38 : vector<1x2xf32>
    %cst_19 = arith.constant 2.500000e-01 : f32
    %40 = vector.broadcast %cst_19 : f32 to vector<1x2xf32>
    %41 = arith.cmpf ogt, %30, %40 : vector<1x2xf32>
    %42 = arith.extui %41 : vector<1x2xi1> to vector<1x2xi32>
    %43 = arith.sitofp %42 : vector<1x2xi32> to vector<1x2xf32>
    %44 = arith.mulf %39, %43 : vector<1x2xf32>
    %45 = vector.shape_cast %44 : vector<1x2xf32> to vector<1x1x2xf32>
    %cst_20 = arith.constant dense<0.000000e+00> : vector<1xf32>
    %46 = vector.multi_reduction <add>, %45, %cst_20 [1, 2] : vector<1x1x2xf32> to vector<1xf32>
    %47 = vector.shape_cast %46 : vector<1xf32> to vector<1x1x1xf32>
    %48 = vector.extract %47[0, 0, 0] : f32 from vector<1x1x1xf32>
    %49 = vector.shape_cast %39 : vector<1x2xf32> to vector<1x1x2xf32>
    %cst_21 = arith.constant dense<0.000000e+00> : vector<1xf32>
    %50 = vector.multi_reduction <add>, %49, %cst_21 [1, 2] : vector<1x1x2xf32> to vector<1xf32>
    %51 = vector.shape_cast %50 : vector<1xf32> to vector<1x1x1xf32>
    %52 = vector.extract %51[0, 0, 0] : f32 from vector<1x1x1xf32>
    %53 = arith.subf %52, %48 : f32
    %54 = vector.shape_cast %43 : vector<1x2xf32> to vector<1x1x2xf32>
    %cst_22 = arith.constant dense<0.000000e+00> : vector<1xf32>
    %55 = vector.multi_reduction <add>, %54, %cst_22 [1, 2] : vector<1x1x2xf32> to vector<1xf32>
    %56 = vector.shape_cast %55 : vector<1xf32> to vector<1x1x1xf32>
    %57 = vector.extract %56[0, 0, 0] : f32 from vector<1x1x1xf32>
    %58 = arith.subf %57, %48 : f32
    %59 = tpu.iota {dimensions = array<i32: 1>} : vector<8x128xi32>
    %c0_i32 = arith.constant 0 : i32
    %60 = vector.broadcast %c0_i32 : i32 to vector<8x128xi32>
    %61 = arith.cmpi eq, %59, %60 : vector<8x128xi32>
    %c1_i32 = arith.constant 1 : i32
    %62 = vector.broadcast %c1_i32 : i32 to vector<8x128xi32>
    %63 = arith.cmpi eq, %59, %62 : vector<8x128xi32>
    %c2_i32 = arith.constant 2 : i32
    %64 = vector.broadcast %c2_i32 : i32 to vector<8x128xi32>
    %65 = arith.cmpi eq, %59, %64 : vector<8x128xi32>
    %c3_i32 = arith.constant 3 : i32
    %66 = vector.broadcast %c3_i32 : i32 to vector<8x128xi32>
    %67 = arith.cmpi eq, %59, %66 : vector<8x128xi32>
    %cst_23 = arith.constant 0.000000e+00 : f32
    %68 = vector.broadcast %58 : f32 to vector<8x128xf32>
    %69 = vector.broadcast %cst_23 : f32 to vector<8x128xf32>
    %70 = arith.select %67, %68, %69 : vector<8x128xi1>, vector<8x128xf32>
    %71 = vector.broadcast %53 : f32 to vector<8x128xf32>
    %72 = arith.select %65, %71, %70 : vector<8x128xi1>, vector<8x128xf32>
    %73 = vector.broadcast %48 : f32 to vector<8x128xf32>
    %74 = arith.select %63, %73, %72 : vector<8x128xi1>, vector<8x128xf32>
    %75 = vector.broadcast %19 : f32 to vector<8x128xf32>
    %76 = arith.select %61, %75, %74 : vector<8x128xi1>, vector<8x128xf32>
    %c0_24 = arith.constant 0 : index
    %c0_25 = arith.constant 0 : index
    %c0_26 = arith.constant 0 : index
    %77 = vector.load %arg4[%c0_24, %c0_25, %c0_26] : memref<1x8x128xf32, #tpu.memory_space<vmem>>, vector<1x8x128xf32>
    %78 = vector.shape_cast %77 : vector<1x8x128xf32> to vector<8x128xf32>
    %79 = vector.shape_cast %76 : vector<8x128xf32> to vector<1x8x128xf32>
    tpu.vector_store %arg4[%c0_24, %c0_25, %c0_26], %79 {strides = array<i32>} : memref<1x8x128xf32, #tpu.memory_space<vmem>>, vector<1x8x128xf32>,
    return
  }
  func.func @transform_0(%arg0: i32) -> (i32, i32) {
    %c0_i32 = arith.constant 0 : i32
    %c0_i32_0 = arith.constant 0 : i32
    return %arg0, %c0_i32 : i32, i32
  }
  func.func @transform_1(%arg0: i32) -> (i32, i32) {
    %c0_i32 = arith.constant 0 : i32
    %c0_i32_0 = arith.constant 0 : i32
    return %arg0, %c0_i32 : i32, i32
  }
  func.func @transform_2(%arg0: i32) -> (i32, i32) {
    %c0_i32 = arith.constant 0 : i32
    %c0_i32_0 = arith.constant 0 : i32
    %c0_i32_1 = arith.constant 0 : i32
    return %c0_i32, %c0_i32_0 : i32, i32
  }
  func.func @transform_3(%arg0: i32) -> (i32, i32, i32) {
    %c0_i32 = arith.constant 0 : i32
    %c0_i32_0 = arith.constant 0 : i32
    %c0_i32_1 = arith.constant 0 : i32
    return %arg0, %c0_i32, %c0_i32_0 : i32, i32, i32
  }
}

</mosaic_0001>

<llo_original>
// kernel: tpu_custom_call.1
$region0: #{tpu_custom_call.1}
  #allocation0 [shape = 'u32[]', space=smem, size = 0x4, offset = 0x4, fixed_abs, tag = 'smem constant byte address 0x4 - core index']
  #allocation1 [shape = 'u32[144,128]{1,0:T(1,128)}', space=vmem, size = 0x12000, scoped, tag = 'internal scratch']
  %s0 = inlined_call_operand.vmem [shape: f32[64,32], index: 0, kind: input, shape index: {}]
  %s1 = inlined_call_operand.vmem [shape: f32[64,32], index: 1, kind: input, shape index: {}]
  %s2 = inlined_call_operand.vmem [shape: f32[32,2], index: 2, kind: input, shape index: {}]
  %s3 = inlined_call_operand.hbm [shape: f32[4,8,128], index: 3, kind: output, shape index: {}]
  %s4 = sld [smem:[#allocation0]]
  $region45: #{tpu_custom_call.1} parent=0
    _
  %s6 = ssub.s32 1, %s4
  %s7 = scalar_select 0, %s6, %s4
  $region1: #{tpu_custom_call.1} parent=0
    #allocation2 [shape = 'u8[8192]{0}', space=vmem, size = 0x2000, scoped, tag = 'output window, operand 0']
    #allocation3 [shape = 's32[2]{0}', space=sflag, size = 0x8, scoped, tag = 'scoped memory for tpu_custom_call.1']
    %8 = vsyncpa [#allocation3], 0
    %s9 = scalar_lea.sflag [#allocation3], 1
    %10 = vsyncpa %s9, 0
    loop: start=0, step=1, limit=6
    $region2: #{tpu_custom_call.1} parent=1 // loop_pre_header
      _
    $region3: #{tpu_custom_call.1} parent=1 // loop_header
      %s12 = sphi 0, %s16
      %p13 = scmp.ge.s32.totalorder %s12, 6
      %s22 = sphi 0, %s24
      %s25 = sphi 0, %s22
      %s26 = sphi 0, %s25
      %s42 = sphi 0, %s26
      %s48 = sphi 0, %s50
      %s51 = sphi 0, %s48
      %s52 = sphi 0, %s51
      %s68 = sphi 0, %s52
      %s72 = sphi 0, %s72
      %s74 = sphi 0, %s72
      %s75 = sphi 0, %s74
      %s89 = sphi 0, %s75
      %s95 = sphi 0, %s97
      %s98 = sphi 0, %s95
      %s99 = sphi 0, %s98
      %s115 = sphi 0, %s99
    $region4: #{tpu_custom_call.1} parent=1 // loop_header_branch
      %15 = sbr.rel (%p13) target = $region8
    $region5: #{tpu_custom_call.1} parent=1 // loop_body
      %s17 = ssub.s32 %s12, 1
      %s18 = ssub.s32 %s12, 2
      %s19 = sadd.s32 %s12, 1
      %s20 = ssub.s32 %s12, %s19
      %p21 = scmp.eq.s32.totalorder %s20, 0
      %s23 = sadd.s32 %s22, 1
      %s24 = scalar_select %p21, %s22, %s23
      %p27 = pneg %p21
      %p28 = scmp.eq.s32.totalorder %s12, 3
      %p29 = por %p27, %p28
      %p30 = scmp.ne.s32.totalorder %s22, %s25
      %p31 = scmp.eq.s32.totalorder %s12, 0
      %p32 = por %p30, %p31
      %p33 = scmp.ne.s32.totalorder %s22, %s25
      %p34 = scmp.eq.s32.totalorder %s17, 3
      %p35 = por %p33, %p34
      %p36 = scmp.ne.s32.totalorder %s25, %s26
      %p37 = scmp.eq.s32.totalorder %s17, 0
      %p38 = por %p36, %p37
      %p39 = scmp.ne.s32.totalorder %s25, %s26
      %p40 = scmp.eq.s32.totalorder %s18, 3
      %p41 = por %p39, %p40
      %p43 = scmp.ne.s32.totalorder %s26, %s42
      %p44 = scmp.eq.s32.totalorder %s18, 0
      %p45 = por %p43, %p44
      %s46 = ssub.s32 %s12, %s19
      %p47 = scmp.eq.s32.totalorder %s46, 0
      %s49 = sadd.s32 %s48, 1
      %s50 = scalar_select %p47, %s48, %s49
      %p53 = pneg %p47
      %p54 = scmp.eq.s32.totalorder %s12, 3
      %p55 = por %p53, %p54
      %p56 = scmp.ne.s32.totalorder %s48, %s51
      %p57 = scmp.eq.s32.totalorder %s12, 0
      %p58 = por %p56, %p57
      %p59 = scmp.ne.s32.totalorder %s48, %s51
      %p60 = scmp.eq.s32.totalorder %s17, 3
      %p61 = por %p59, %p60
      %p62 = scmp.ne.s32.totalorder %s51, %s52
      %p63 = scmp.eq.s32.totalorder %s17, 0
      %p64 = por %p62, %p63
      %p65 = scmp.ne.s32.totalorder %s51, %s52
      %p66 = scmp.eq.s32.totalorder %s18, 3
      %p67 = por %p65, %p66
      %p69 = scmp.ne.s32.totalorder %s52, %s68
      %p70 = scmp.eq.s32.totalorder %s18, 0
      %p71 = por %p69, %p70
      %s73 = sadd.s32 %s72, 1
      %p76 = scmp.eq.s32.totalorder %s12, 3
      %p77 = scmp.ne.s32.totalorder %s72, %s74
      %p78 = scmp.eq.s32.totalorder %s12, 0
      %p79 = por %p77, %p78
      %p80 = scmp.ne.s32.totalorder %s72, %s74
      %p81 = scmp.eq.s32.totalorder %s17, 3
      %p82 = por %p80, %p81
      %p83 = scmp.ne.s32.totalorder %s74, %s75
      %p84 = scmp.eq.s32.totalorder %s17, 0
      %p85 = por %p83, %p84
      %p86 = scmp.ne.s32.totalorder %s74, %s75
      %p87 = scmp.eq.s32.totalorder %s18, 3
      %p88 = por %p86, %p87
      %p90 = scmp.ne.s32.totalorder %s75, %s89
      %p91 = scmp.eq.s32.totalorder %s18, 0
      %p92 = por %p90, %p91
      %s93 = ssub.s32 %s12, %s19
      %p94 = scmp.eq.s32.totalorder %s93, 0
      %s96 = sadd.s32 %s95, 1
      %s97 = scalar_select %p94, %s95, %s96
      %p100 = pneg %p94
      %p101 = scmp.eq.s32.totalorder %s12, 3
      %p102 = por %p100, %p101
      %p103 = scmp.ne.s32.totalorder %s95, %s98
      %p104 = scmp.eq.s32.totalorder %s12, 0
      %p105 = por %p103, %p104
      %p106 = scmp.ne.s32.totalorder %s95, %s98
      %p107 = scmp.eq.s32.totalorder %s17, 3
      %p108 = por %p106, %p107
      %p109 = scmp.ne.s32.totalorder %s98, %s99
      %p110 = scmp.eq.s32.totalorder %s17, 0
      %p111 = por %p109, %p110
      %p112 = scmp.ne.s32.totalorder %s98, %s99
      %p113 = scmp.eq.s32.totalorder %s18, 3
      %p114 = por %p112, %p113
      %p116 = scmp.ne.s32.totalorder %s99, %s115
      %p117 = scmp.eq.s32.totalorder %s18, 0
      %p118 = por %p116, %p117
      %p119 = scmp.le.s32.totalorder 1, %s12
      %p120 = scmp.lt.s32.totalorder %s12, 5
      %p121 = pnand %p119, %p120
      %p122 = pneg %p121
      // Predicated region
      $region9: #{tpu_custom_call.1} parent=5 // pred_check
        _
      $region10: #{tpu_custom_call.1} parent=5 // pred_check_branch
        %124 = sbr.rel (%p121) target = $region12
      $region11: #{tpu_custom_call.1} parent=5 // pred_region
        %s125 = ssub.s32 %s12, 1
        // Predicated region
        $region13: #{tpu_custom_call.1} parent=11 // pred_check
          %p126 = pneg %p85
        $region14: #{tpu_custom_call.1} parent=11 // pred_check_branch
          %128 = sbr.rel (%p126) target = $region16
        $region15: #{tpu_custom_call.1} parent=11 // pred_region
          _
        $region16: #{tpu_custom_call.1} parent=11 // pred_fallthru
          _
      $region12: #{tpu_custom_call.1} parent=5 // pred_fallthru
        _
      %p129 = scmp.lt.s32.totalorder %s12, 4
      // Predicated region
      $region17: #{tpu_custom_call.1} parent=5 // pred_check
        %p130 = pneg %p129
      $region18: #{tpu_custom_call.1} parent=5 // pred_check_branch
        %132 = sbr.rel (%p130) target = $region20
      $region19: #{tpu_custom_call.1} parent=5 // pred_region
        // Predicated region
        $region21: #{tpu_custom_call.1} parent=19 // pred_check
          %p133 = pneg %p32
        $region22: #{tpu_custom_call.1} parent=19 // pred_check_branch
          %135 = sbr.rel (%p133) target = $region24
        $region23: #{tpu_custom_call.1} parent=19 // pred_region
          %s136 = smul.u32 2, %s12
          %p137 = scmp.lt.s32.totalorder %s136, 7
          %s138 = scalar_select %p137, %s136, 7
          %s139 = smul.addr %s138, 8
          %s140 = scalar_lea.vmem %s0, %s139
          %s141 = smul.u32 2, %s12
        $region24: #{tpu_custom_call.1} parent=19 // pred_fallthru
          _
        // Predicated region
        $region25: #{tpu_custom_call.1} parent=19 // pred_check
          %p142 = pneg %p58
        $region26: #{tpu_custom_call.1} parent=19 // pred_check_branch
          %144 = sbr.rel (%p142) target = $region28
        $region27: #{tpu_custom_call.1} parent=19 // pred_region
          %s145 = smul.u32 2, %s12
          %p146 = scmp.lt.s32.totalorder %s145, 7
          %s147 = scalar_select %p146, %s145, 7
          %s148 = smul.addr %s147, 8
          %s149 = scalar_lea.vmem %s1, %s148
          %s150 = smul.u32 2, %s12
        $region28: #{tpu_custom_call.1} parent=19 // pred_fallthru
          _
      $region20: #{tpu_custom_call.1} parent=5 // pred_fallthru
        _
      %p151 = scmp.le.s32.totalorder 1, %s12
      %p152 = scmp.lt.s32.totalorder %s12, 5
      %p153 = pnand %p151, %p152
      %p154 = pneg %p153
      // Predicated region
      $region29: #{tpu_custom_call.1} parent=5 // pred_check
        _
      $region30: #{tpu_custom_call.1} parent=5 // pred_check_branch
        %156 = sbr.rel (%p153) target = $region32
      $region31: #{tpu_custom_call.1} parent=5 // pred_region
        %s157 = ssub.s32 %s12, 1
        %s158 = smul.u32 2, %s17
        %p159 = scmp.lt.s32.totalorder %s158, 7
        %s160 = scalar_select %p159, %s158, 7
        %s161 = smul.addr %s160, 8
        %s162 = scalar_lea.vmem %s0, %s161
        %p163 = pneg %p38
        %p164 = pneg %p35
        %s165 = smul.u32 2, %s17
        %p166 = scmp.lt.s32.totalorder %s165, 7
        %s167 = scalar_select %p166, %s165, 7
        %s168 = smul.addr %s167, 8
        %s169 = scalar_lea.vmem %s1, %s168
        %p170 = pneg %p64
        %p171 = pneg %p61
        %p172 = pneg %p85
        %p173 = pneg %p82
        %p174 = pneg %p111
        %p175 = pneg %p108
        %s176 = sand.u32 %s98, 1
        %s177 = scalar_lea.sflag [#allocation3], %s176
        %s178 = sand.u32 %s98, 1
        %s179 = smul.addr %s178, 8
        %s180 = scalar_lea.vmem [#allocation2], %s179
        %s181 = smul.u32 2, %s17
        %p182 = scmp.lt.s32.totalorder %s181, 7
        %s183 = scalar_select %p182, %s181, 7
        %s184 = smul.addr %s183, 8
        %s185 = scalar_lea.vmem %s0, %s184
        %s186 = smul.u32 2, %s17
        %s187 = smul.u32 2, %s17
        %p188 = scmp.lt.s32.totalorder %s187, 7
        %s189 = scalar_select %p188, %s187, 7
        %s190 = smul.addr %s189, 8
        %s191 = scalar_lea.vmem %s1, %s190
        %s192 = smul.u32 2, %s17
        %v193 = vld [vmem:[%s185] sm:$0xff]
        %v194 = vld [vmem:[%s185 + $0x8] sm:$0xff]
        %v195 = vld [vmem:[%s191] sm:$0xff]
        %v196 = vld [vmem:[%s191 + $0x8] sm:$0xff]
        %v197 = vmax.f32 %v193, 1e-07
        %v198 = vmax.f32 %v194, 1e-07
        %v199 = vmin.f32 %v197, 0.9999999
        %v200 = vmin.f32 %v198, 0.9999999
        %v201 = vlog2.pop %v199
        %v202 = vmul.f32 %v201, 0.6931472
        %v203 = vlog2.pop %v200
        %v204 = vmul.f32 %v203, 0.6931472
        %v205 = vmul.f32 %v195, %v202
        %v206 = vmul.f32 %v196, %v204
        %v207 = vsub.f32 1.0, %v195
        %v208 = vsub.f32 1.0, %v196
        %v209 = vsub.f32 1.0, %v199
        %v210 = vsub.f32 1.0, %v200
        %v211 = vlog2.pop %v209
        %v212 = vmul.f32 %v211, 0.6931472
        %v213 = vlog2.pop %v210
        %v214 = vmul.f32 %v213, 0.6931472
        %v215 = vmul.f32 %v207, %v212
        %v216 = vmul.f32 %v208, %v214
        %v217 = vadd.f32 %v205, %v215
        %v218 = vadd.f32 %v206, %v216
        %vm219 = vcmask 261120
        %v220 = vsel %vm219, %v217, 0.0
        %v221 = vsel %vm219, %v218, 0.0
        %v222 = vadd.f32 %v220, %v221
        %223 = vadd.xlane.f32.xlu0 %v222
        %v224 = vpop.xlane.xlu0 %223
        %v225 = vrot.slane %v224, 4
        %v226 = vadd.f32 %v224, %v225
        %v227 = vrot.slane %v226, 2
        %v228 = vadd.f32 %v226, %v227
        %v229 = vrot.slane %v228, 1
        %v230 = vadd.f32 %v228, %v229
        %s231 = vtos %v230
        %s232 = ssub.f32 0.0, %s231
        %v233 = vsel %vm219, %v193, 0.0
        %v234 = vsel %vm219, %v194, 0.0
        %v235 = vadd.f32 %v233, %v234
        %v236 = vrot.slane %v235, 4
        %v237 = vadd.f32 %v235, %v236
        %v238 = vrot.slane %v237, 2
        %v239 = vadd.f32 %v237, %v238
        %v240 = vrot.slane %v239, 1
        %v241 = vadd.f32 %v239, %v240
        %v242 = vmul.f32 %v241, 0.0625
        %v243 = vsel %vm219, %v195, 0.0
        %v244 = vsel %vm219, %v196, 0.0
        %v245 = vadd.f32 %v243, %v244
        %v246 = vrot.slane %v245, 4
        %v247 = vadd.f32 %v245, %v246
        %v248 = vrot.slane %v247, 2
        %v249 = vadd.f32 %v247, %v248
        %v250 = vrot.slane %v249, 1
        %v251 = vadd.f32 %v249, %v250
        %v252 = vmul.f32 %v251, 0.0625
        %v253 = vld [vmem:[%s2] sm:$0xff]
        %v254 = vld [vmem:[%s2 + $0x8] sm:$0xff]
        %v255 = vld [vmem:[%s2 + $0x10] sm:$0xff]
        %v256 = vld [vmem:[%s2 + $0x18] sm:$0xff]
        %v258 = vsel %vm219, %v242, 0
        %260 = vmatprep.subr.mxu0 0.0
        %261 = vmatpush1.msra.mxu0 %v253
        %262 = vmatprep.subr.mxu0 0.0
        %263 = vmatpush1.msra.mxu0 %v254
        %264 = vmatprep.subr.mxu0 0.0
        %265 = vmatpush1.msra.mxu0 %v255
        %266 = vmatprep.subr.mxu0 0.0
        %267 = vmatpush1.msra.mxu0 %v256
        %268 = vmatprep.subr.mxu0 0.0
        %269 = vmatpush1.msra.mxu0 0.0
        %270 = vmatprep.subr.mxu0 0.0
        %271 = vmatpush1.msra.mxu0 0.0
        %272 = vmatprep.subr.mxu0 0.0
        %273 = vmatpush1.msra.mxu0 0.0
        %274 = vmatprep.subr.mxu0 0.0
        %275 = vmatpush1.msra.mxu0 0.0
        %276 = vmatprep.subr.mxu0 0.0
        %277 = vmatpush1.msra.mxu0 0.0
        %278 = vmatprep.subr.mxu0 0.0
        %279 = vmatpush1.msra.mxu0 0.0
        %280 = vmatprep.subr.mxu0 0.0
        %281 = vmatpush1.msra.mxu0 0.0
        %282 = vmatprep.subr.mxu0 0.0
        %283 = vmatpush1.msra.mxu0 0.0
        %284 = vmatprep.subr.mxu0 0.0
        %285 = vmatpush1.msra.mxu0 0.0
        %286 = vmatprep.subr.mxu0 0.0
        %287 = vmatpush1.msra.mxu0 0.0
        %288 = vmatprep.subr.mxu0 0.0
        %289 = vmatpush1.msra.mxu0 0.0
        %290 = vmatprep.subr.mxu0 0.0
        %291 = vmatpush1.msra.mxu0 0.0
        %292 = vmatprep.subr.mxu0 0.0
        %293 = vmatpush1.msra.mxu0 0.0
        %294 = vmatprep.subr.mxu0 0.0
        %295 = vmatpush1.msra.mxu0 0.0
        %296 = vmatprep.subr.mxu0 0.0
        %297 = vmatpush1.msra.mxu0 0.0
        %298 = vmatprep.subr.mxu0 0.0
        %299 = vmatpush1.msra.mxu0 0.0
        %300 = vmatprep.subr.mxu0 0.0
        %301 = vmatpush1.msra.mxu0 0.0
        %302 = vmatprep.subr.mxu0 0.0
        %303 = vmatpush1.msra.mxu0 0.0
        %304 = vmatprep.subr.mxu0 0.0
        %305 = vmatpush1.msra.mxu0 0.0
        %306 = vmatprep.subr.mxu0 0.0
        %307 = vmatpush1.msra.mxu0 0.0
        %308 = vmatprep.subr.mxu0 0.0
        %309 = vmatpush1.msra.mxu0 0.0
        %310 = vmatprep.subr.mxu0 0.0
        %311 = vmatpush1.msra.mxu0 0.0
        %312 = vmatprep.subr.mxu0 0.0
        %313 = vmatpush1.msra.mxu0 0.0
        %314 = vmatprep.subr.mxu0 0.0
        %315 = vmatpush1.msra.mxu0 0.0
        %316 = vmatprep.subr.mxu0 0.0
        %317 = vmatpush1.msra.mxu0 0.0
        %318 = vmatprep.subr.mxu0 0.0
        %319 = vmatpush1.msra.mxu0 0.0
        %320 = vmatprep.subr.mxu0 0.0
        %321 = vmatpush1.msra.mxu0 0.0
        %322 = vmatprep.subr.mxu0 0.0
        %323 = vmatpush1.msra.mxu0 0.0
        %324 = vmatprep.mubr.f32.mxu0 0.0
        %325 = vmatmul.mubr.f32.gmra.mrb[0].mxu0 %v258
        %v326 = vpop.f32.mrb[0].mxu0
        %v327 = vadd.f32 0.0, %v326
        %v328 = vpop.f32.mrb[0].mxu0
        %329 = vdwg.mxu0
        %v331 = vsel %vm219, %v252, 0
        %333 = vmatprep.subr.mxu0 0.0
        %334 = vmatpush1.msra.mxu0 %v253
        %335 = vmatprep.subr.mxu0 0.0
        %336 = vmatpush1.msra.mxu0 %v254
        %337 = vmatprep.subr.mxu0 0.0
        %338 = vmatpush1.msra.mxu0 %v255
        %339 = vmatprep.subr.mxu0 0.0
        %340 = vmatpush1.msra.mxu0 %v256
        %341 = vmatprep.subr.mxu0 0.0
        %342 = vmatpush1.msra.mxu0 0.0
        %343 = vmatprep.subr.mxu0 0.0
        %344 = vmatpush1.msra.mxu0 0.0
        %345 = vmatprep.subr.mxu0 0.0
        %346 = vmatpush1.msra.mxu0 0.0
        %347 = vmatprep.subr.mxu0 0.0
        %348 = vmatpush1.msra.mxu0 0.0
        %349 = vmatprep.subr.mxu0 0.0
        %350 = vmatpush1.msra.mxu0 0.0
        %351 = vmatprep.subr.mxu0 0.0
        %352 = vmatpush1.msra.mxu0 0.0
        %353 = vmatprep.subr.mxu0 0.0
        %354 = vmatpush1.msra.mxu0 0.0
        %355 = vmatprep.subr.mxu0 0.0
        %356 = vmatpush1.msra.mxu0 0.0
        %357 = vmatprep.subr.mxu0 0.0
        %358 = vmatpush1.msra.mxu0 0.0
        %359 = vmatprep.subr.mxu0 0.0
        %360 = vmatpush1.msra.mxu0 0.0
        %361 = vmatprep.subr.mxu0 0.0
        %362 = vmatpush1.msra.mxu0 0.0
        %363 = vmatprep.subr.mxu0 0.0
        %364 = vmatpush1.msra.mxu0 0.0
        %365 = vmatprep.subr.mxu0 0.0
        %366 = vmatpush1.msra.mxu0 0.0
        %367 = vmatprep.subr.mxu0 0.0
        %368 = vmatpush1.msra.mxu0 0.0
        %369 = vmatprep.subr.mxu0 0.0
        %370 = vmatpush1.msra.mxu0 0.0
        %371 = vmatprep.subr.mxu0 0.0
        %372 = vmatpush1.msra.mxu0 0.0
        %373 = vmatprep.subr.mxu0 0.0
        %374 = vmatpush1.msra.mxu0 0.0
        %375 = vmatprep.subr.mxu0 0.0
        %376 = vmatpush1.msra.mxu0 0.0
        %377 = vmatprep.subr.mxu0 0.0
        %378 = vmatpush1.msra.mxu0 0.0
        %379 = vmatprep.subr.mxu0 0.0
        %380 = vmatpush1.msra.mxu0 0.0
        %381 = vmatprep.subr.mxu0 0.0
        %382 = vmatpush1.msra.mxu0 0.0
        %383 = vmatprep.subr.mxu0 0.0
        %384 = vmatpush1.msra.mxu0 0.0
        %385 = vmatprep.subr.mxu0 0.0
        %386 = vmatpush1.msra.mxu0 0.0
        %387 = vmatprep.subr.mxu0 0.0
        %388 = vmatpush1.msra.mxu0 0.0
        %389 = vmatprep.subr.mxu0 0.0
        %390 = vmatpush1.msra.mxu0 0.0
        %391 = vmatprep.subr.mxu0 0.0
        %392 = vmatpush1.msra.mxu0 0.0
        %393 = vmatprep.subr.mxu0 0.0
        %394 = vmatpush1.msra.mxu0 0.0
        %395 = vmatprep.subr.mxu0 0.0
        %396 = vmatpush1.msra.mxu0 0.0
        %397 = vmatprep.mubr.f32.mxu0 0.0
        %398 = vmatmul.mubr.f32.gmra.mrb[0].mxu0 %v331
        %v399 = vpop.f32.mrb[0].mxu0
        %v400 = vadd.f32 0.0, %v399
        %v401 = vpop.f32.mrb[0].mxu0
        %402 = vdwg.mxu0
        %v403 = vsub.f32 %v327, 0.25
        %v404 = vmul.f32 %v403, 50.0
        %v405 = vxor.u32 %v404, 2147483648
        %v406 = vmul.f32 %v405, 1.442695
        %v407 = vpow.pop %v406
        %v408 = vadd.f32 %v407, 1.0
        %v409 = vrcp.pop %v408
        %v410 = vmul.f32 1.0, %v409
        %vm411 = vcmp.gt.f32.partialorder %v400, 0.25
        %v412 = vsel %vm411, 1, 0
        %v413 = vcvt.s32.f32 %v412
        %v414 = vmul.f32 %v410, %v413
        %vm415 = vcmask 8192
        %v416 = vsel %vm415, %v414, 0.0
        %417 = vadd.xlane.f32.xlu0 %v416
        %v418 = vpop.xlane.xlu0 %417
        %v419 = vrot.slane %v418, 4
        %v420 = vadd.f32 %v418, %v419
        %v421 = vrot.slane %v420, 2
        %v422 = vadd.f32 %v420, %v421
        %v423 = vrot.slane %v422, 1
        %v424 = vadd.f32 %v422, %v423
        %s425 = vtos %v424
        %v426 = vsel %vm415, %v410, 0.0
        %427 = vadd.xlane.f32.xlu0 %v426
        %v428 = vpop.xlane.xlu0 %427
        %v429 = vrot.slane %v428, 4
        %v430 = vadd.f32 %v428, %v429
        %v431 = vrot.slane %v430, 2
        %v432 = vadd.f32 %v430, %v431
        %v433 = vrot.slane %v432, 1
        %v434 = vadd.f32 %v432, %v433
        %s435 = vtos %v434
        %s436 = ssub.f32 %s435, %s425
        %v437 = vsel %vm415, %v413, 0.0
        %438 = vadd.xlane.f32.xlu0 %v437
        %v439 = vpop.xlane.xlu0 %438
        %v440 = vrot.slane %v439, 4
        %v441 = vadd.f32 %v439, %v440
        %v442 = vrot.slane %v441, 2
        %v443 = vadd.f32 %v441, %v442
        %v444 = vrot.slane %v443, 1
        %v445 = vadd.f32 %v443, %v444
        %s446 = vtos %v445
        %s447 = ssub.f32 %s446, %s425
        %v448 = vlaneseq
        %v449 = vand.u32 %v448, 127
        %vm450 = vcmp.eq.s32.totalorder %v449, 0
        %vm451 = vcmp.eq.s32.totalorder %v449, 1
        %vm452 = vcmp.eq.s32.totalorder %v449, 2
        %vm453 = vcmp.eq.s32.totalorder %v449, 3
        %v454 = vstv %s447
        %v455 = vsel %vm453, %v454, 0.0
        %v456 = vstv %s436
        %v457 = vsel %vm452, %v456, %v455
        %v458 = vstv %s425
        %v459 = vsel %vm451, %v458, %v457
        %v460 = vstv %s232
        %v461 = vsel %vm450, %v460, %v459
        %462 = vst [vmem:[%s180] sm:$0xff] %v461
        %s463 = sand.u32 %s98, 1
        %s464 = scalar_lea.sflag [#allocation3], %s463
        %s465 = sand.u32 %s98, 1
        %s466 = smul.addr %s465, 8
        %s467 = scalar_lea.vmem [#allocation2], %s466
        // Predicated region
        $region33: #{tpu_custom_call.1} parent=31 // pred_check
          %p468 = pneg %p108
        $region34: #{tpu_custom_call.1} parent=31 // pred_check_branch
          %470 = sbr.rel (%p468) target = $region36
        $region35: #{tpu_custom_call.1} parent=31 // pred_region
          %s472 = ssub.s32 128, 128
          %473 = vsyncadd %s464, %s472
          %s474 = smul.addr %s17, 128
          %s475 = scalar_lea.hbm %s3, %s474
          %s477 = sshll.u32 %s467, 4
          %s478 = int_to_ptr.vmem [resolvable:$true] %s477
          %480 = dma.vmem_to_hbm [thread:$0]  %s478, 128, %s475, %s464
        $region36: #{tpu_custom_call.1} parent=31 // pred_fallthru
          _
      $region32: #{tpu_custom_call.1} parent=5 // pred_fallthru
        _
      %p481 = scmp.le.s32.totalorder 2, %s12
      // Predicated region
      $region37: #{tpu_custom_call.1} parent=5 // pred_check
        %p482 = pneg %p481
      $region38: #{tpu_custom_call.1} parent=5 // pred_check_branch
        %484 = sbr.rel (%p482) target = $region40
      $region39: #{tpu_custom_call.1} parent=5 // pred_region
        %s485 = ssub.s32 %s12, 2
        // Predicated region
        $region41: #{tpu_custom_call.1} parent=39 // pred_check
          %p486 = pneg %p114
        $region42: #{tpu_custom_call.1} parent=39 // pred_check_branch
          %488 = sbr.rel (%p486) target = $region44
        $region43: #{tpu_custom_call.1} parent=39 // pred_region
          %s489 = sand.u32 %s99, 1
          %s490 = scalar_lea.sflag [#allocation3], %s489
          %s491 = sand.u32 %s99, 1
          %s492 = smul.addr %s491, 8
          %s493 = scalar_lea.vmem [#allocation2], %s492
          %494 = dma.done %s490, 128
        $region44: #{tpu_custom_call.1} parent=39 // pred_fallthru
          _
      $region40: #{tpu_custom_call.1} parent=5 // pred_fallthru
        _
    $region6: #{tpu_custom_call.1} parent=1 // loop_footer
      %s16 = sadd.s32 1, %s12
    $region7: #{tpu_custom_call.1} parent=1 // loop_footer_branch
      %11 = sbr.rel target = $region3
    $region8: #{tpu_custom_call.1} parent=1 // loop_exit
      _
    %495 = vsyncpa [#allocation3], 1
    %s496 = scalar_lea.sflag [#allocation3], 1
    %497 = vsyncpa %s496, 1

</llo_original>
